<compile_context>
chip_gen: v6e
topology: v6e:2x2x1
jax: 0.10.0
libtpu: 0.0.40
codegen_flags: <defaults>
</compile_context>

<pallas_src>
import functools

import jax
import jax.numpy as jnp
import numpy as np
from jax.experimental import pallas as pl
from jax.experimental.pallas import tpu as pltpu


def make_divisible(v, divisor=8, min_value=None):
    min_value = min_value or divisor
    new_v = max(min_value, int(v + divisor / 2) // divisor * divisor)
    if new_v < 0.9 * v:
        new_v += divisor
    return new_v


# --------------------------------------------------------------------------- #
# Pass 1: depthwise conv + per-(batch, channel) sum / sum-of-squares (for BN). #
# --------------------------------------------------------------------------- #
def _dw_stats_kernel(x_ref, wdw_ref, sum_ref, sumsq_ref, *, n_taps, n_phases, l1):
    # x_ref block: (1, S, C_in, Lph); phase r holds x_pad[b, c, S*i + r].
    xb = x_ref[...]
    phases = [xb[0, r] for r in range(n_phases)]            # each (C_in, Lph)

    dw = None
    for k in range(n_taps):                                  # tap = contiguous lane slice
        off = k // n_phases
        tap = phases[k % n_phases][:, off:off + l1]          # (C_in, L1)
        term = tap * wdw_ref[k]                              # (C_in, 1) lane-broadcast
        dw = term if dw is None else dw + term

    sum_ref[0] = jnp.sum(dw, axis=1, keepdims=True)          # (C_in, 1)
    sumsq_ref[0] = jnp.sum(dw * dw, axis=1, keepdims=True)   # (C_in, 1)


# --------------------------------------------------------------------------- #
# Pass 2: BN (fused FMA) -> pointwise matmul (MXU) -> SE gate -> single store. #
# --------------------------------------------------------------------------- #
def _bn_pw_se_kernel(x_ref, wdw_ref, gamma_ref, beta_ref, wpw_ref,
                     w1t_ref, b1_ref, w2_ref, b2_ref, sum_ref, sumsq_ref,
                     out_ref, *, n_taps, n_phases, l1, l2, inv_n, eps, mxu_dtype):
    # ---- depthwise conv (recomputed; cheaper than an HBM round trip of dw) ----
    xb = x_ref[...]
    phases = [xb[0, r] for r in range(n_phases)]
    dw = None
    for k in range(n_taps):
        off = k // n_phases
        tap = phases[k % n_phases][:, off:off + l1]
        term = tap * wdw_ref[k]
        dw = term if dw is None else dw + term               # (C_in, L1), f32

    # ---- BatchNorm1d (training-mode batch stats) fused into a single FMA ----
    csum = jnp.sum(sum_ref[...], axis=0)                     # (C_in, 1) over batch
    csumsq = jnp.sum(sumsq_ref[...], axis=0)                 # (C_in, 1)
    mean = csum * inv_n
    var = csumsq * inv_n - mean * mean                       # biased, one-pass
    scale = gamma_ref[...] * jax.lax.rsqrt(var + eps)        # (C_in, 1)
    shift = beta_ref[...] - mean * scale
    y = dw * scale + shift                                   # (C_in, L1) FMA

    # ---- pointwise 1x1 conv: one 2-D MXU matmul (bf16 operands, f32 acc) ----
    pw = jnp.dot(wpw_ref[...].astype(mxu_dtype), y.astype(mxu_dtype),
                 preferred_element_type=jnp.float32)         # (C_out, L1)

    # ---- squeeze & excitation (pool over padded length l2; pad cols are 0) ----
    s = jnp.sum(pw, axis=1, keepdims=True) * (1.0 / l2)      # (C_out, 1)
    h = jnp.maximum(
        jnp.sum(w1t_ref[...] * s, axis=0, keepdims=True) + b1_ref[...], 0.0)  # (1, R)
    g = jax.nn.sigmoid(
        jnp.sum(w2_ref[...] * h, axis=1, keepdims=True) + b2_ref[...])        # (C_out, 1)
    scaled = pw * g                                          # (C_out, L1)

    # ---- assemble the zero-padded NCL tile and store it ONCE (no double store)
    zcol = jnp.zeros((scaled.shape[0], 1), scaled.dtype)
    out_ref[0] = jnp.concatenate([zcol, scaled, zcol], axis=1)   # (C_out, L2)


def mbconv_forward(x_ncl, params, *, kernel_size, stride, eps=1e-5,
                   mxu_dtype=jnp.bfloat16):
    """x_ncl: (B, C_in, L) in PyTorch NCL layout. Returns (B, C_out, L1 + 2) NCL."""
    B, C_in, L = x_ncl.shape
    K, S = kernel_size, stride
    P = K - S                                   # SepConv1d depthwise padding
    L1 = (L + 2 * P - K) // S + 1               # depthwise output length
    L2 = L1 + 2                                 # pointwise (padding=1) length
    # per-phase length: enough for all tap offsets and for an exact reshape
    Lph = max(L1 + (K - 1) // S, (L + 2 * P + S - 1) // S)
    C_out = params['w_pw'].shape[0]
    R = params['w1'].shape[0]

    # Single cheap phase split (replaces the K-fold tap stack AND both NCL<->NLC
    # wrapper transposes of the previous version):
    #   xp[b, r, c, i] = x_pad[b, c, S*i + r]
    x_pad = jnp.pad(x_ncl, ((0, 0), (0, 0), (P, S * Lph - L - P)))
    xp = jnp.transpose(x_pad.reshape(B, C_in, Lph, S), (0, 3, 1, 2))  # (B,S,C_in,Lph)

    # weights reshaped so per-channel vectors sit on sublanes (lane-broadcastable)
    w_dw = params['w_dw'].reshape(K, C_in, 1)
    gamma = params['gamma'].reshape(C_in, 1)
    beta = params['beta'].reshape(C_in, 1)
    w_pw = params['w_pw']                        # (C_out, C_in)
    w1t = jnp.transpose(params['w1'])            # (C_out, R)
    b1 = params['b1'].reshape(1, R)
    w2 = params['w2']                            # (C_out, R)
    b2 = params['b2'].reshape(C_out, 1)

    vmem = pl.BlockSpec(memory_space=pltpu.MemorySpace.VMEM)
    x_spec = pl.BlockSpec((1, S, C_in, Lph), lambda b: (b, 0, 0, 0))
    cparams = pltpu.CompilerParams(
        dimension_semantics=("parallel",),            # megacore-shardable grid
        vmem_limit_bytes=48 * 1024 * 1024)            # explicit, safe on 64 MiB v7x

    # ---- pass 1: depthwise + per-(batch, channel) sum / sumsq (tiny outputs) ----
    bsum, bsumsq = pl.pallas_call(
        functools.partial(_dw_stats_kernel, n_taps=K, n_phases=S, l1=L1),
        grid=(B,),
        out_shape=(jax.ShapeDtypeStruct((B, C_in, 1), jnp.float32),
                   jax.ShapeDtypeStruct((B, C_in, 1), jnp.float32)),
        in_specs=[x_spec, vmem],
        out_specs=(pl.BlockSpec((1, C_in, 1), lambda b: (b, 0, 0)),
                   pl.BlockSpec((1, C_in, 1), lambda b: (b, 0, 0))),
        compiler_params=cparams,
    )(xp, w_dw)

    # ---- pass 2: normalize + pointwise + SE gate + padded NCL store ----
    out = pl.pallas_call(
        functools.partial(_bn_pw_se_kernel, n_taps=K, n_phases=S, l1=L1, l2=L2,
                          inv_n=1.0 / float(B * L1), eps=eps, mxu_dtype=mxu_dtype),
        grid=(B,),
        out_shape=jax.ShapeDtypeStruct((B, C_out, L2), jnp.float32),
        in_specs=[x_spec] + [vmem] * 10,
        out_specs=pl.BlockSpec((1, C_out, L2), lambda b: (b, 0, 0)),
        compiler_params=cparams,
    )(xp, w_dw, gamma, beta, w_pw, w1t, b1, w2, b2, bsum, bsumsq)
    # NOTE: for very long sequences, add an inner L-tile grid axis (halo via
    # manual DMA) on top of the batch grid; the batch grid already bounds VMEM
    # residency at ~S*C_in*L floats per step.
    return out


def mbconv_reference(x_ncl, params, *, kernel_size, stride, eps=1e-5):
    """Pure-JAX reference mirroring the PyTorch forward (for verification)."""
    K, S = kernel_size, stride
    P = K - S
    C_in = x_ncl.shape[1]
    w_dw = jnp.transpose(params['w_dw'])[:, None, :]         # (C_in, 1, K)
    dw = jax.lax.conv_general_dilated(
        x_ncl, w_dw, window_strides=(S,), padding=[(P, P)],
        dimension_numbers=('NCH', 'OIH', 'NCH'), feature_group_count=C_in)
    mean = jnp.mean(dw, axis=(0, 2), keepdims=True)
    var = jnp.mean((dw - mean) ** 2, axis=(0, 2), keepdims=True)
    y = (dw - mean) / jnp.sqrt(var + eps)
    y = y * params['gamma'].reshape(1, -1, 1) + params['beta'].reshape(1, -1, 1)
    y_pad = jnp.pad(y, ((0, 0), (0, 0), (1, 1)))             # pointwise padding=1
    pw = jnp.einsum('oc,bcl->bol', params['w_pw'], y_pad)
    s = jnp.mean(pw, axis=2)                                 # adaptive_avg_pool1d(., 1)
    h = jax.nn.relu(s @ params['w1'].T + params['b1'])
    g = jax.nn.sigmoid(h @ params['w2'].T + params['b2'])
    return pw * g[:, :, None]


if __name__ == "__main__":
    # MBConv(in_channels=4, out_channels=8, kernel_size=3, stride=2, use_se=True)
    B, C_in, L = 2, 4, 16
    C_out, K, S = 8, 3, 2
    # SqueezeExcitation(in_channels=C_out) -> out_channels defaults to -1:
    R = make_divisible(max(-1, 8) // 4, 8)                   # = 8 reduced channels

    key = jax.random.PRNGKey(0)
    ks = jax.random.split(key, 8)
    params = {
        'w_dw':  jax.random.normal(ks[0], (K, C_in), jnp.float32) * 0.4,
        'gamma': jnp.ones((C_in,), jnp.float32),             # BN default init
        'beta':  jnp.zeros((C_in,), jnp.float32),
        'w_pw':  jax.random.normal(ks[1], (C_out, C_in), jnp.float32) * 0.4,
        'w1':    jax.random.normal(ks[2], (R, C_out), jnp.float32) * 0.3,
        'b1':    jax.random.normal(ks[3], (R,), jnp.float32) * 0.1,
        'w2':    jax.random.normal(ks[4], (C_out, R), jnp.float32) * 0.3,
        'b2':    jax.random.normal(ks[5], (C_out,), jnp.float32) * 0.1,
    }
    x = jax.random.normal(ks[6], (B, C_in, L), jnp.float32)

    L1 = (L + 2 * (K - S) - K) // S + 1
    ref = mbconv_reference(x, params, kernel_size=K, stride=S)

    # exact-math path (f32 MXU operands): tight check
    out_f32 = mbconv_forward(x, params, kernel_size=K, stride=S,
                             mxu_dtype=jnp.float32)
    jax.block_until_ready(out_f32)
    assert out_f32.shape == (B, C_out, L1 + 2), out_f32.shape
    np.testing.assert_allclose(np.asarray(out_f32), np.asarray(ref),
                               rtol=1e-3, atol=1e-4)

    # default path (bf16 MXU operands, f32 accumulation): loose check vs f32 ref
    out = mbconv_forward(x, params, kernel_size=K, stride=S)
    jax.block_until_ready(out)
    assert out.shape == (B, C_out, L1 + 2), out.shape
    np.testing.assert_allclose(np.asarray(out), np.asarray(ref),
                               rtol=3e-2, atol=2e-2)

    print("KERNEL_OK")
</pallas_src>

<mosaic_0001>
module attributes {stable_mosaic.version = 11 : i64} {
  func.func @_dw_stats_kernel(%arg0: i32, %arg1: memref<1x2x4x9xf32, #tpu.memory_space<vmem>>, %arg2: memref<3x4x1xf32, #tpu.memory_space<vmem>>, %arg3: memref<1x4x1xf32, #tpu.memory_space<vmem>>, %arg4: memref<1x4x1xf32, #tpu.memory_space<vmem>>) attributes {dimension_semantics = [#tpu.dimension_semantics<parallel>], iteration_bounds = array<i64: 2>, scalar_prefetch = 0 : i64, scratch_operands = 0 : i64, tpu.core_type = #tpu.core_type<tc>, window_params = [{transform_indices = @transform_0, window_bounds = array<i64: 1, 2, 4, 9>}, {pipeline_mode = #tpu.pipeline_mode<synchronous>, transform_indices = @transform_1, window_bounds = array<i64: 3, 4, 1>}, {transform_indices = @transform_2, window_bounds = array<i64: 1, 4, 1>}, {transform_indices = @transform_3, window_bounds = array<i64: 1, 4, 1>}]} {
    %c0 = arith.constant 0 : index
    %c0_0 = arith.constant 0 : index
    %c0_1 = arith.constant 0 : index
    %c0_2 = arith.constant 0 : index
    %0 = vector.load %arg1[%c0, %c0_0, %c0_1, %c0_2] : memref<1x2x4x9xf32, #tpu.memory_space<vmem>>, vector<1x2x4x9xf32>
    %1 = vector.extract_strided_slice %0 {offsets = [0, 0, 0, 0], sizes = [1, 1, 4, 9], strides = [1, 1, 1, 1]} : vector<1x2x4x9xf32> to vector<1x1x4x9xf32>
    %2 = vector.shape_cast %1 : vector<1x1x4x9xf32> to vector<4x9xf32>
    %3 = vector.extract_strided_slice %0 {offsets = [0, 1, 0, 0], sizes = [1, 1, 4, 9], strides = [1, 1, 1, 1]} : vector<1x2x4x9xf32> to vector<1x1x4x9xf32>
    %4 = vector.shape_cast %3 : vector<1x1x4x9xf32> to vector<4x9xf32>
    %5 = vector.extract_strided_slice %2 {offsets = [0, 0], sizes = [4, 8], strides = [1, 1]} : vector<4x9xf32> to vector<4x8xf32>
    %c0_3 = arith.constant 0 : index
    %c0_4 = arith.constant 0 : index
    %c0_5 = arith.constant 0 : index
    %6 = vector.load %arg2[%c0_3, %c0_4, %c0_5] : memref<3x4x1xf32, #tpu.memory_space<vmem>>, vector<1x4x1xf32>
    %7 = vector.shape_cast %6 : vector<1x4x1xf32> to vector<4x1xf32>
    %8 = vector.broadcast %7 : vector<4x1xf32> to vector<4x8xf32>
    %9 = arith.mulf %5, %8 : vector<4x8xf32>
    %10 = vector.extract_strided_slice %4 {offsets = [0, 0], sizes = [4, 8], strides = [1, 1]} : vector<4x9xf32> to vector<4x8xf32>
    %c1 = arith.constant 1 : index
    %c0_6 = arith.constant 0 : index
    %c0_7 = arith.constant 0 : index
    %11 = vector.load %arg2[%c1, %c0_6, %c0_7] : memref<3x4x1xf32, #tpu.memory_space<vmem>>, vector<1x4x1xf32>
    %12 = vector.shape_cast %11 : vector<1x4x1xf32> to vector<4x1xf32>
    %13 = vector.broadcast %12 : vector<4x1xf32> to vector<4x8xf32>
    %14 = arith.mulf %10, %13 : vector<4x8xf32>
    %15 = arith.addf %9, %14 : vector<4x8xf32>
    %16 = vector.extract_strided_slice %2 {offsets = [0, 1], sizes = [4, 8], strides = [1, 1]} : vector<4x9xf32> to vector<4x8xf32>
    %c2 = arith.constant 2 : index
    %c0_8 = arith.constant 0 : index
    %c0_9 = arith.constant 0 : index
    %17 = vector.load %arg2[%c2, %c0_8, %c0_9] : memref<3x4x1xf32, #tpu.memory_space<vmem>>, vector<1x4x1xf32>
    %18 = vector.shape_cast %17 : vector<1x4x1xf32> to vector<4x1xf32>
    %19 = vector.broadcast %18 : vector<4x1xf32> to vector<4x8xf32>
    %20 = arith.mulf %16, %19 : vector<4x8xf32>
    %21 = arith.addf %15, %20 : vector<4x8xf32>
    %cst = arith.constant dense<0.000000e+00> : vector<4xf32>
    %22 = vector.multi_reduction <add>, %21, %cst [1] : vector<4x8xf32> to vector<4xf32>
    %23 = vector.shape_cast %22 : vector<4xf32> to vector<4x1xf32>
    %c0_10 = arith.constant 0 : index
    %c0_11 = arith.constant 0 : index
    %c0_12 = arith.constant 0 : index
    %24 = vector.load %arg3[%c0_10, %c0_11, %c0_12] : memref<1x4x1xf32, #tpu.memory_space<vmem>>, vector<1x4x1xf32>
    %25 = vector.shape_cast %24 : vector<1x4x1xf32> to vector<4x1xf32>
    %26 = vector.shape_cast %23 : vector<4x1xf32> to vector<1x4x1xf32>
    tpu.vector_store %arg3[%c0_10, %c0_11, %c0_12], %26 {strides = array<i32>} : memref<1x4x1xf32, #tpu.memory_space<vmem>>, vector<1x4x1xf32>,
    %27 = arith.mulf %21, %21 : vector<4x8xf32>
    %cst_13 = arith.constant dense<0.000000e+00> : vector<4xf32>
    %28 = vector.multi_reduction <add>, %27, %cst_13 [1] : vector<4x8xf32> to vector<4xf32>
    %29 = vector.shape_cast %28 : vector<4xf32> to vector<4x1xf32>
    %c0_14 = arith.constant 0 : index
    %c0_15 = arith.constant 0 : index
    %c0_16 = arith.constant 0 : index
    %30 = vector.load %arg4[%c0_14, %c0_15, %c0_16] : memref<1x4x1xf32, #tpu.memory_space<vmem>>, vector<1x4x1xf32>
    %31 = vector.shape_cast %30 : vector<1x4x1xf32> to vector<4x1xf32>
    %32 = vector.shape_cast %29 : vector<4x1xf32> to vector<1x4x1xf32>
    tpu.vector_store %arg4[%c0_14, %c0_15, %c0_16], %32 {strides = array<i32>} : memref<1x4x1xf32, #tpu.memory_space<vmem>>, vector<1x4x1xf32>,
    return
  }
  func.func @transform_0(%arg0: i32) -> (i32, i32, i32, i32) {
    %c0_i32 = arith.constant 0 : i32
    %c0_i32_0 = arith.constant 0 : i32
    %c0_i32_1 = arith.constant 0 : i32
    %c0_i32_2 = arith.constant 0 : i32
    return %arg0, %c0_i32, %c0_i32_0, %c0_i32_1 : i32, i32, i32, i32
  }
  func.func @transform_1(%arg0: i32) -> (i32, i32, i32) {
    %c0_i32 = arith.constant 0 : i32
    %c0_i32_0 = arith.constant 0 : i32
    %c0_i32_1 = arith.constant 0 : i32
    %c0_i32_2 = arith.constant 0 : i32
    return %c0_i32, %c0_i32_0, %c0_i32_1 : i32, i32, i32
  }
  func.func @transform_2(%arg0: i32) -> (i32, i32, i32) {
    %c0_i32 = arith.constant 0 : i32
    %c0_i32_0 = arith.constant 0 : i32
    %c0_i32_1 = arith.constant 0 : i32
    return %arg0, %c0_i32, %c0_i32_0 : i32, i32, i32
  }
  func.func @transform_3(%arg0: i32) -> (i32, i32, i32) {
    %c0_i32 = arith.constant 0 : i32
    %c0_i32_0 = arith.constant 0 : i32
    %c0_i32_1 = arith.constant 0 : i32
    return %arg0, %c0_i32, %c0_i32_0 : i32, i32, i32
  }
}

</mosaic_0001>

<llo_original>
// kernel: tpu_custom_call.1
$region0: #{tpu_custom_call.1}
  #allocation0 [shape = 'u32[]', space=smem, size = 0x4, offset = 0x4, fixed_abs, tag = 'smem constant byte address 0x4 - core index']
  #allocation1 [shape = 'u32[144,128]{1,0:T(1,128)}', space=vmem, size = 0x12000, scoped, tag = 'internal scratch']
  %s0 = inlined_call_operand.hbm [shape: f32[2,2,4,9], index: 0, kind: input, shape index: {}]
  %s1 = inlined_call_operand.vmem [shape: f32[3,4,1], index: 1, kind: input, shape index: {}]
  %s2 = inlined_call_operand.vmem [shape: f32[2,4,1], index: 2, kind: output, shape index: {0}]
  %s3 = inlined_call_operand.vmem [shape: f32[2,4,1], index: 3, kind: output, shape index: {1}]
  %4 = xla_tuple %s2, %s3
  %s5 = sld [smem:[#allocation0]]
  $region53: #{tpu_custom_call.1} parent=0
    _
  %s7 = ssub.s32 1, %s5
  %s8 = scalar_select 0, %s7, %s5
  $region1: #{tpu_custom_call.1} parent=0
    #allocation2 [shape = 'u8[8192]{0}', space=vmem, size = 0x2000, scoped, tag = 'input window, operand 0']
    #allocation3 [shape = 's32[2]{0}', space=sflag, size = 0x8, scoped, tag = 'scoped memory for tpu_custom_call.1']
    %9 = vsyncpa [#allocation3], 0
    %s10 = scalar_lea.sflag [#allocation3], 1
    %11 = vsyncpa %s10, 0
    loop: start=0, step=1, limit=4
    $region2: #{tpu_custom_call.1} parent=1 // loop_pre_header
      _
    $region3: #{tpu_custom_call.1} parent=1 // loop_header
      %s13 = sphi 0, %s17
      %p14 = scmp.ge.s32.totalorder %s13, 4
      %s23 = sphi 0, %s25
      %s26 = sphi 0, %s23
      %s27 = sphi 0, %s26
      %s43 = sphi 0, %s27
      %s47 = sphi 0, %s47
      %s49 = sphi 0, %s47
      %s50 = sphi 0, %s49
      %s64 = sphi 0, %s50
      %s70 = sphi 0, %s72
      %s73 = sphi 0, %s70
      %s74 = sphi 0, %s73
      %s90 = sphi 0, %s74
      %s96 = sphi 0, %s98
      %s99 = sphi 0, %s96
      %s100 = sphi 0, %s99
      %s116 = sphi 0, %s100
    $region4: #{tpu_custom_call.1} parent=1 // loop_header_branch
      %16 = sbr.rel (%p14) target = $region8
    $region5: #{tpu_custom_call.1} parent=1 // loop_body
      %s18 = ssub.s32 %s13, 1
      %s19 = ssub.s32 %s13, 2
      %s20 = sadd.s32 %s13, 1
      %s21 = ssub.s32 %s13, %s20
      %p22 = scmp.eq.s32.totalorder %s21, 0
      %s24 = sadd.s32 %s23, 1
      %s25 = scalar_select %p22, %s23, %s24
      %p28 = pneg %p22
      %p29 = scmp.eq.s32.totalorder %s13, 1
      %p30 = por %p28, %p29
      %p31 = scmp.ne.s32.totalorder %s23, %s26
      %p32 = scmp.eq.s32.totalorder %s13, 0
      %p33 = por %p31, %p32
      %p34 = scmp.ne.s32.totalorder %s23, %s26
      %p35 = scmp.eq.s32.totalorder %s18, 1
      %p36 = por %p34, %p35
      %p37 = scmp.ne.s32.totalorder %s26, %s27
      %p38 = scmp.eq.s32.totalorder %s18, 0
      %p39 = por %p37, %p38
      %p40 = scmp.ne.s32.totalorder %s26, %s27
      %p41 = scmp.eq.s32.totalorder %s19, 1
      %p42 = por %p40, %p41
      %p44 = scmp.ne.s32.totalorder %s27, %s43
      %p45 = scmp.eq.s32.totalorder %s19, 0
      %p46 = por %p44, %p45
      %s48 = sadd.s32 %s47, 1
      %p51 = scmp.eq.s32.totalorder %s13, 1
      %p52 = scmp.ne.s32.totalorder %s47, %s49
      %p53 = scmp.eq.s32.totalorder %s13, 0
      %p54 = por %p52, %p53
      %p55 = scmp.ne.s32.totalorder %s47, %s49
      %p56 = scmp.eq.s32.totalorder %s18, 1
      %p57 = por %p55, %p56
      %p58 = scmp.ne.s32.totalorder %s49, %s50
      %p59 = scmp.eq.s32.totalorder %s18, 0
      %p60 = por %p58, %p59
      %p61 = scmp.ne.s32.totalorder %s49, %s50
      %p62 = scmp.eq.s32.totalorder %s19, 1
      %p63 = por %p61, %p62
      %p65 = scmp.ne.s32.totalorder %s50, %s64
      %p66 = scmp.eq.s32.totalorder %s19, 0
      %p67 = por %p65, %p66
      %s68 = ssub.s32 %s13, %s20
      %p69 = scmp.eq.s32.totalorder %s68, 0
      %s71 = sadd.s32 %s70, 1
      %s72 = scalar_select %p69, %s70, %s71
      %p75 = pneg %p69
      %p76 = scmp.eq.s32.totalorder %s13, 1
      %p77 = por %p75, %p76
      %p78 = scmp.ne.s32.totalorder %s70, %s73
      %p79 = scmp.eq.s32.totalorder %s13, 0
      %p80 = por %p78, %p79
      %p81 = scmp.ne.s32.totalorder %s70, %s73
      %p82 = scmp.eq.s32.totalorder %s18, 1
      %p83 = por %p81, %p82
      %p84 = scmp.ne.s32.totalorder %s73, %s74
      %p85 = scmp.eq.s32.totalorder %s18, 0
      %p86 = por %p84, %p85
      %p87 = scmp.ne.s32.totalorder %s73, %s74
      %p88 = scmp.eq.s32.totalorder %s19, 1
      %p89 = por %p87, %p88
      %p91 = scmp.ne.s32.totalorder %s74, %s90
      %p92 = scmp.eq.s32.totalorder %s19, 0
      %p93 = por %p91, %p92
      %s94 = ssub.s32 %s13, %s20
      %p95 = scmp.eq.s32.totalorder %s94, 0
      %s97 = sadd.s32 %s96, 1
      %s98 = scalar_select %p95, %s96, %s97
      %p101 = pneg %p95
      %p102 = scmp.eq.s32.totalorder %s13, 1
      %p103 = por %p101, %p102
      %p104 = scmp.ne.s32.totalorder %s96, %s99
      %p105 = scmp.eq.s32.totalorder %s13, 0
      %p106 = por %p104, %p105
      %p107 = scmp.ne.s32.totalorder %s96, %s99
      %p108 = scmp.eq.s32.totalorder %s18, 1
      %p109 = por %p107, %p108
      %p110 = scmp.ne.s32.totalorder %s99, %s100
      %p111 = scmp.eq.s32.totalorder %s18, 0
      %p112 = por %p110, %p111
      %p113 = scmp.ne.s32.totalorder %s99, %s100
      %p114 = scmp.eq.s32.totalorder %s19, 1
      %p115 = por %p113, %p114
      %p117 = scmp.ne.s32.totalorder %s100, %s116
      %p118 = scmp.eq.s32.totalorder %s19, 0
      %p119 = por %p117, %p118
      %p120 = scmp.le.s32.totalorder 1, %s13
      %p121 = scmp.lt.s32.totalorder %s13, 3
      %p122 = pnand %p120, %p121
      %p123 = pneg %p122
      // Predicated region
      $region9: #{tpu_custom_call.1} parent=5 // pred_check
        _
      $region10: #{tpu_custom_call.1} parent=5 // pred_check_branch
        %125 = sbr.rel (%p122) target = $region12
      $region11: #{tpu_custom_call.1} parent=5 // pred_region
        %s126 = ssub.s32 %s13, 1
        // Predicated region
        $region13: #{tpu_custom_call.1} parent=11 // pred_check
          %p127 = pneg %p60
        $region14: #{tpu_custom_call.1} parent=11 // pred_check_branch
          %129 = sbr.rel (%p127) target = $region16
        $region15: #{tpu_custom_call.1} parent=11 // pred_region
          _
        $region16: #{tpu_custom_call.1} parent=11 // pred_fallthru
          _
      $region12: #{tpu_custom_call.1} parent=5 // pred_fallthru
        _
      %p130 = scmp.lt.s32.totalorder %s13, 2
      // Predicated region
      $region17: #{tpu_custom_call.1} parent=5 // pred_check
        %p131 = pneg %p130
      $region18: #{tpu_custom_call.1} parent=5 // pred_check_branch
        %133 = sbr.rel (%p131) target = $region20
      $region19: #{tpu_custom_call.1} parent=5 // pred_region
        // Predicated region
        $region21: #{tpu_custom_call.1} parent=19 // pred_check
          %p134 = pneg %p33
        $region22: #{tpu_custom_call.1} parent=19 // pred_check_branch
          %136 = sbr.rel (%p134) target = $region24
        $region23: #{tpu_custom_call.1} parent=19 // pred_region
          %s137 = sand.u32 %s23, 1
          %s138 = scalar_lea.sflag [#allocation3], %s137
          %s139 = sand.u32 %s23, 1
          %s140 = smul.addr %s139, 8
          %s141 = scalar_lea.vmem [#allocation2], %s140
          %s143 = ssub.s32 128, 128
          %144 = vsyncadd %s138, %s143
          %s145 = smul.addr %s13, 2
          %s146 = smul.addr %s145, 64
          %s147 = scalar_lea.hbm %s0, %s146
          %s148 = sshll.u32 %s141, 4
          %s149 = int_to_ptr.vmem [resolvable:$true] %s148
          %154 = dma.hbm_to_vmem [thread:$0]  %s147, 128, %s149, %s138, 64, 64, 4
        $region24: #{tpu_custom_call.1} parent=19 // pred_fallthru
          _
      $region20: #{tpu_custom_call.1} parent=5 // pred_fallthru
        _
      %p155 = scmp.le.s32.totalorder 1, %s13
      %p156 = scmp.lt.s32.totalorder %s13, 3
      %p157 = pnand %p155, %p156
      %p158 = pneg %p157
      // Predicated region
      $region25: #{tpu_custom_call.1} parent=5 // pred_check
        _
      $region26: #{tpu_custom_call.1} parent=5 // pred_check_branch
        %160 = sbr.rel (%p157) target = $region28
      $region27: #{tpu_custom_call.1} parent=5 // pred_region
        %s161 = ssub.s32 %s13, 1
        %s162 = sand.u32 %s26, 1
        %s163 = scalar_lea.sflag [#allocation3], %s162
        %s164 = sand.u32 %s26, 1
        %s165 = smul.addr %s164, 8
        %s166 = scalar_lea.vmem [#allocation2], %s165
        // Predicated region
        $region29: #{tpu_custom_call.1} parent=27 // pred_check
          %p167 = pneg %p39
        $region30: #{tpu_custom_call.1} parent=27 // pred_check_branch
          %169 = sbr.rel (%p167) target = $region32
        $region31: #{tpu_custom_call.1} parent=27 // pred_region
          %170 = dma.done %s163, 128
        $region32: #{tpu_custom_call.1} parent=27 // pred_fallthru
          _
        %s171 = sand.u32 %s26, 1
        %s172 = scalar_lea.sflag [#allocation3], %s171
        %s173 = sand.u32 %s26, 1
        %s174 = smul.addr %s173, 8
        %s175 = scalar_lea.vmem [#allocation2], %s174
        %p176 = pneg %p39
        %p177 = pneg %p36
        %p178 = pneg %p60
        %p179 = pneg %p57
        %p180 = pneg %p86
        %p181 = pneg %p83
        %p182 = scmp.lt.s32.totalorder %s18, 1
        %s183 = scalar_select %p182, %s18, 1
        %s184 = smul.addr %s183, 4
        %s185 = scalar_lea.vmem %s2, %s184
        %p186 = pneg %p112
        %p187 = pneg %p109
        %p188 = scmp.lt.s32.totalorder %s18, 1
        %s189 = scalar_select %p188, %s18, 1
        %s190 = smul.addr %s189, 4
        %s191 = scalar_lea.vmem %s3, %s190
        %p192 = scmp.lt.s32.totalorder %s18, 1
        %s193 = scalar_select %p192, %s18, 1
        %s194 = smul.addr %s193, 4
        %s195 = scalar_lea.vmem %s2, %s194
        %p196 = scmp.lt.s32.totalorder %s18, 1
        %s197 = scalar_select %p196, %s18, 1
        %s198 = smul.addr %s197, 4
        %s199 = scalar_lea.vmem %s3, %s198
        %v200 = vld [vmem:[%s166] sm:$0xf]
        %v201 = vld [vmem:[%s166 + $0x4] sm:$0xf]
        %v202 = vld [vmem:[%s1] sm:$0xf]
        %204 = vset.pattern.permute.xlu0 0
        %205 = vperm.xlu0 %204, %v202
        %v206 = vpop.permute.xlu0 %205
        %v208 = vmul.f32 %v200, %v206
        %s209 = scalar_lea.vmem %s1, 4
        %v210 = vld [vmem:[%s209] sm:$0xf]
        %212 = vset.pattern.permute.xlu0 0
        %213 = vperm.xlu0 %212, %v210
        %v214 = vpop.permute.xlu0 %213
        %v216 = vmul.f32 %v201, %v214
        %v217 = vadd.f32 %v208, %v216
        %s218 = scalar_lea.vmem %s1, 8
        %v219 = vld [vmem:[%s218] sm:$0xf]
        %221 = vset.pattern.permute.xlu0 0
        %222 = vperm.xlu0 %221, %v219
        %v223 = vpop.permute.xlu0 %222
        %v225 = vmul.f32 %v200, %v223
        %227 = vrot.lane.b32.xlu0 %v225, 127
        %v228 = vpop.permute.xlu0 %227
        %v230 = vadd.f32 %v217, %v228
        %vm231 = vcmask 60416
        %v232 = vsel %vm231, %v230, 0.0
        %233 = vadd.xlane.f32.xlu0 %v232
        %v234 = vpop.xlane.xlu0 %233
        %vm235 = vcmask 3072
        %236 = vst.msk [vmem:[%s195] sm:$0xf] %vm235, %v234
        %v237 = vmul.f32 %v230, %v230
        %v238 = vsel %vm231, %v237, 0.0
        %239 = vadd.xlane.f32.xlu0 %v238
        %v240 = vpop.xlane.xlu0 %239
        %241 = vst.msk [vmem:[%s199] sm:$0xf] %vm235, %v240
        %p242 = scmp.lt.s32.totalorder %s18, 1
        %s243 = scalar_select %p242, %s18, 1
        %s244 = smul.addr %s243, 4
        %s245 = scalar_lea.vmem %s2, %s244
        %p246 = scmp.lt.s32.totalorder %s18, 1
        %s247 = scalar_select %p246, %s18, 1
        %s248 = smul.addr %s247, 4
        %s249 = scalar_lea.vmem %s3, %s248
        // Predicated region
        $region33: #{tpu_custom_call.1} parent=27 // pred_check
          %p250 = pneg %p83
        $region34: #{tpu_custom_call.1} parent=27 // pred_check_branch
          %252 = sbr.rel (%p250) target = $region36
        $region35: #{tpu_custom_call.1} parent=27 // pred_region
          _
        $region36: #{tpu_custom_call.1} parent=27 // pred_fallthru
          _
        // Predicated region
        $region37: #{tpu_custom_call.1} parent=27 // pred_check
          %p253 = pneg %p109
        $region38: #{tpu_custom_call.1} parent=27 // pred_check_branch
          %255 = sbr.rel (%p253) target = $region40
        $region39: #{tpu_custom_call.1} parent=27 // pred_region
          _
        $region40: #{tpu_custom_call.1} parent=27 // pred_fallthru
          _
      $region28: #{tpu_custom_call.1} parent=5 // pred_fallthru
        _
      %p256 = scmp.le.s32.totalorder 2, %s13
      // Predicated region
      $region41: #{tpu_custom_call.1} parent=5 // pred_check
        %p257 = pneg %p256
      $region42: #{tpu_custom_call.1} parent=5 // pred_check_branch
        %259 = sbr.rel (%p257) target = $region44
      $region43: #{tpu_custom_call.1} parent=5 // pred_region
        %s260 = ssub.s32 %s13, 2
        // Predicated region
        $region45: #{tpu_custom_call.1} parent=43 // pred_check
          %p261 = pneg %p89
        $region46: #{tpu_custom_call.1} parent=43 // pred_check_branch
          %263 = sbr.rel (%p261) target = $region48
        $region47: #{tpu_custom_call.1} parent=43 // pred_region
          %p264 = scmp.lt.s32.totalorder %s19, 1
          %s265 = scalar_select %p264, %s19, 1
          %s266 = smul.addr %s265, 4
          %s267 = scalar_lea.vmem %s2, %s266
        $region48: #{tpu_custom_call.1} parent=43 // pred_fallthru
          _
        // Predicated region
        $region49: #{tpu_custom_call.1} parent=43 // pred_check
          %p268 = pneg %p115
        $region50: #{tpu_custom_call.1} parent=43 // pred_check_branch
          %270 = sbr.rel (%p268) target = $region52
        $region51: #{tpu_custom_call.1} parent=43 // pred_region
          %p271 = scmp.lt.s32.totalorder %s19, 1
          %s272 = scalar_select %p271, %s19, 1
          %s273 = smul.addr %s272, 4
          %s274 = scalar_lea.vmem %s3, %s273
        $region52: #{tpu_custom_call.1} parent=43 // pred_fallthru
          _
      $region44: #{tpu_custom_call.1} parent=5 // pred_fallthru
        _
    $region6: #{tpu_custom_call.1} parent=1 // loop_footer
      %s17 = sadd.s32 1, %s13
    $region7: #{tpu_custom_call.1} parent=1 // loop_footer_branch
      %12 = sbr.rel target = $region3
    $region8: #{tpu_custom_call.1} parent=1 // loop_exit
      _
    %275 = vsyncpa [#allocation3], 1
    %s276 = scalar_lea.sflag [#allocation3], 1
    %277 = vsyncpa %s276, 1

</llo_original>
